<compile_context>
chip_gen: v7x
topology: tpu7x:2x2x1
jax: 0.10.0
libtpu: 0.0.40
codegen_flags: <defaults>
</compile_context>

<pallas_src>
import jax
import jax.numpy as jnp
from jax.experimental import pallas as pl
from jax.experimental.pallas import tpu as pltpu


def attention_kernel(local_ref, binary_ref,
                     wpair_t_ref, wbin_t_ref, bbin_ref, watt_ref, batt_ref,
                     glob_ref):
    """One grid step == block_b batch elements.

    local_ref  : (Bt, N, H)      float32
    binary_ref : (Bt, N, N, Bs)  float32
    wpair_t    : (H, H)   compute dtype (pre-transposed: in x out, no bias)
    wbin_t     : (Bs, H)  compute dtype (pre-transposed: in x out)
    bbin       : (1, H)   float32
    watt       : (1, H)   float32
    batt       : (1, 1)   float32
    glob_ref   : (Bt, N, H)      float32
    """
    Bt, N, H = local_ref.shape
    Bs = binary_ref.shape[-1]
    cdt = wpair_t_ref.dtype                       # MXU input dtype (f32 or bf16)

    local = local_ref[...]                        # (Bt, N, H) f32

    # fcapair, per atom:  lp[b, i] = local[b, i] @ Wp^T
    local2d = local.reshape(Bt * N, H).astype(cdt)
    lp = jnp.dot(local2d, wpair_t_ref[...],
                 preferred_element_type=jnp.float32).reshape(Bt, N, H)

    # fcbinary:  (Bt*N*N, Bs) @ (Bs, H) + bias
    bin2d = binary_ref[...].reshape(Bt * N * N, Bs).astype(cdt)
    abin = (jnp.dot(bin2d, wbin_t_ref[...], preferred_element_type=jnp.float32)
            + bbin_ref[...]).reshape(Bt, N, N, H)

    # relu(fcapair(local_pair) + fcbinary(binary));  pair never materialized alone.
    feats = jnp.maximum(lp[:, :, None, :] + lp[:, None, :, :] + abin, 0.0)

    # fcattention + sigmoid: width-1 matmul -> lane-dense VPU mul + XLU reduce.
    logits = jnp.sum(feats * watt_ref[...], axis=-1) + batt_ref[...]   # (Bt, N, N)
    score = jax.nn.sigmoid(logits)

    # global_feats[b, i, :] = sum_j score[b, i, j] * local[b, j, :]
    glob = jnp.einsum('bij,bjh->bih', score.astype(cdt), local.astype(cdt),
                      preferred_element_type=jnp.float32)
    glob_ref[...] = glob.astype(glob_ref.dtype)


def _pick_block_b(B, N, H, Bs, vmem_budget_bytes=32 << 20):
    """Largest batch block fitting a conservative VMEM budget, preferring a grid
    of >= 2 steps so the batch axis can shard across v7x's 2 TensorCores."""
    pad = lambda d: -(-d // 128) * 128            # minor-dim lane padding
    per_elem = 4 * (2 * N * N * pad(Bs)           # binary block (double-buffered)
                    + 4 * N * pad(H)              # local in + glob out (double-buffered)
                    + 3 * N * N * pad(H))         # f32 intermediates (abin / feats)
    cap = max(1, vmem_budget_bytes // max(per_elem, 1))
    divisors = [d for d in range(1, B + 1) if B % d == 0 and d <= cap] or [1]
    multi_step = [d for d in divisors if B // d >= 2]
    return max(multi_step) if multi_step else max(divisors)


def attention_forward(local_feats, binary_feats, sparse_idx, params,
                      *, block_b=None, compute_dtype=jnp.bfloat16):
    local_feats = jnp.asarray(local_feats, jnp.float32)
    binary_feats = jnp.asarray(binary_feats, jnp.float32)
    B, N, H = local_feats.shape
    Bs = binary_feats.shape[-1]
    if block_b is None:
        block_b = _pick_block_b(B, N, H, Bs)
    assert B % block_b == 0, (B, block_b)

    f32 = jnp.float32
    # Pre-transpose once in HBM (torch Linear weights are (out, in)); cast MXU
    # operands to compute_dtype (accumulation stays f32 inside the kernel).
    wpair_t = jnp.asarray(params["wpair"], f32).T.astype(compute_dtype)   # (H, H)
    wbin_t = jnp.asarray(params["wbin"], f32).T.astype(compute_dtype)     # (Bs, H)
    bbin = jnp.asarray(params["bbin"], f32).reshape(1, H)
    watt = jnp.asarray(params["watt"], f32).reshape(1, H)
    batt = jnp.asarray(params["batt"], f32).reshape(1, 1)

    glob = pl.pallas_call(
        attention_kernel,
        out_shape=jax.ShapeDtypeStruct((B, N, H), jnp.float32),
        grid_spec=pltpu.PrefetchScalarGridSpec(
            num_scalar_prefetch=0,
            grid=(B // block_b,),
            in_specs=[
                pl.BlockSpec((block_b, N, H), lambda b: (b, 0, 0)),
                pl.BlockSpec((block_b, N, N, Bs), lambda b: (b, 0, 0, 0)),
                pl.BlockSpec((H, H), lambda b: (0, 0)),
                pl.BlockSpec((Bs, H), lambda b: (0, 0)),
                pl.BlockSpec((1, H), lambda b: (0, 0)),
                pl.BlockSpec((1, H), lambda b: (0, 0)),
                pl.BlockSpec((1, 1), lambda b: (0, 0)),
            ],
            out_specs=pl.BlockSpec((block_b, N, H), lambda b: (b, 0, 0)),
        ),
        compiler_params=pltpu.CompilerParams(
            dimension_semantics=("parallel",),        # shard batch blocks across TCs
            vmem_limit_bytes=48 * 1024 * 1024,        # headroom under v7x's 64 MiB
        ),
    )(local_feats, binary_feats, wpair_t, wbin_t, bbin, watt, batt)

    # Sparse gathers (pure indexing glue); local_pair rebuilt from S rows only —
    # the dense (B, N, N, H) pair tensor never touches HBM.
    b_idx, i_idx, j_idx = sparse_idx[:, 0], sparse_idx[:, 1], sparse_idx[:, 2]
    local_pair = local_feats[b_idx, i_idx] + local_feats[b_idx, j_idx]
    global_pair = glob[b_idx, i_idx] + glob[b_idx, j_idx]
    return local_pair, global_pair


def reference_forward(local_feats, binary_feats, sparse_idx, params):
    wpair, wbin = params["wpair"], params["wbin"]
    bbin, watt, batt = params["bbin"], params["watt"], params["batt"]
    local_pair = local_feats[:, None, :, :] + local_feats[:, :, None, :]
    feats = jax.nn.relu(local_pair @ wpair.T + (binary_feats @ wbin.T + bbin))
    score = jax.nn.sigmoid(feats @ watt.T + batt)
    glob = jnp.sum(local_feats[:, None, :, :] * score, axis=2)
    b, i, j = sparse_idx[:, 0], sparse_idx[:, 1], sparse_idx[:, 2]
    return local_pair[b, i, j], glob[b, i] + glob[b, j]


if __name__ == "__main__":
    B, N, H, Bs, S = 2, 8, 32, 16, 6
    key = jax.random.PRNGKey(0)
    k1, k2, k3, k4, k5, k6, k7, k8 = jax.random.split(key, 8)

    local_feats = jax.random.normal(k1, (B, N, H), dtype=jnp.float32)
    binary_feats = jax.random.normal(k2, (B, N, N, Bs), dtype=jnp.float32)
    sparse_idx = jnp.stack([
        jax.random.randint(k3, (S,), 0, B),
        jax.random.randint(k4, (S,), 0, N),
        jax.random.randint(k5, (S,), 0, N),
    ], axis=1).astype(jnp.int32)

    # Deterministic parameter init (torch Linear convention: weight is (out, in)).
    params = {
        "wpair": jax.random.normal(k6, (H, H), dtype=jnp.float32) * 0.1,
        "wbin": jax.random.normal(k7, (H, Bs), dtype=jnp.float32) * 0.1,
        "bbin": jnp.linspace(-0.1, 0.1, H, dtype=jnp.float32),
        "watt": jax.random.normal(k8, (1, H), dtype=jnp.float32) * 0.1,
        "batt": jnp.array([0.05], dtype=jnp.float32),
    }

    lp_ref, gp_ref = reference_forward(local_feats, binary_feats, sparse_idx, params)

    # Exact-precision path (f32 MXU inputs).
    lp32, gp32 = attention_forward(local_feats, binary_feats, sparse_idx, params,
                                   compute_dtype=jnp.float32)
    jax.block_until_ready((lp32, gp32))
    assert jnp.allclose(lp32, lp_ref, atol=1e-4, rtol=1e-4), "local_pair mismatch (f32)"
    assert jnp.allclose(gp32, gp_ref, atol=1e-4, rtol=1e-4), "global_pair mismatch (f32)"

    # Default fast path (bf16 MXU inputs, f32 accumulation).
    lp16, gp16 = attention_forward(local_feats, binary_feats, sparse_idx, params)
    jax.block_until_ready((lp16, gp16))
    assert jnp.allclose(lp16, lp_ref, atol=1e-4, rtol=1e-4), "local_pair mismatch (bf16)"
    assert jnp.allclose(gp16, gp_ref, atol=5e-2, rtol=5e-2), "global_pair mismatch (bf16)"

    print("KERNEL_OK")
</pallas_src>

<mosaic_0001>
module attributes {stable_mosaic.version = 11 : i64} {
  func.func @attention_kernel(%arg0: i32, %arg1: memref<1x8x32xf32, #tpu.memory_space<vmem>>, %arg2: memref<1x8x8x16xf32, #tpu.memory_space<vmem>>, %arg3: memref<32x32xf32, #tpu.memory_space<vmem>>, %arg4: memref<16x32xf32, #tpu.memory_space<vmem>>, %arg5: memref<1x32xf32, #tpu.memory_space<vmem>>, %arg6: memref<1x32xf32, #tpu.memory_space<vmem>>, %arg7: memref<1x1xf32, #tpu.memory_space<vmem>>, %arg8: memref<1x8x32xf32, #tpu.memory_space<vmem>>) attributes {dimension_semantics = [#tpu.dimension_semantics<parallel>], iteration_bounds = array<i64: 2>, scalar_prefetch = 0 : i64, scratch_operands = 0 : i64, tpu.core_type = #tpu.core_type<tc>, window_params = [{transform_indices = @transform_0, window_bounds = array<i64: 1, 8, 32>}, {transform_indices = @transform_1, window_bounds = array<i64: 1, 8, 8, 16>}, {pipeline_mode = #tpu.pipeline_mode<synchronous>, transform_indices = @transform_2, window_bounds = array<i64: 32, 32>}, {pipeline_mode = #tpu.pipeline_mode<synchronous>, transform_indices = @transform_3, window_bounds = array<i64: 16, 32>}, {pipeline_mode = #tpu.pipeline_mode<synchronous>, transform_indices = @transform_4, window_bounds = array<i64: 1, 32>}, {pipeline_mode = #tpu.pipeline_mode<synchronous>, transform_indices = @transform_5, window_bounds = array<i64: 1, 32>}, {pipeline_mode = #tpu.pipeline_mode<synchronous>, transform_indices = @transform_6, window_bounds = array<i64: 1, 1>}, {transform_indices = @transform_7, window_bounds = array<i64: 1, 8, 32>}]} {
    %c0 = arith.constant 0 : index
    %c0_0 = arith.constant 0 : index
    %c0_1 = arith.constant 0 : index
    %0 = vector.load %arg1[%c0, %c0_0, %c0_1] : memref<1x8x32xf32, #tpu.memory_space<vmem>>, vector<1x8x32xf32>
    %1 = vector.shape_cast %0 : vector<1x8x32xf32> to vector<8x32xf32>
    %c0_2 = arith.constant 0 : index
    %c0_3 = arith.constant 0 : index
    %2 = vector.load %arg3[%c0_2, %c0_3] : memref<32x32xf32, #tpu.memory_space<vmem>>, vector<32x32xf32>
    %cst = arith.constant dense<0.000000e+00> : vector<8x32xf32>
    %3 = tpu.matmul %1, %2, %cst {dimension_numbers = #tpu.dot_dimension_numbers<[1], [0], [0], [1], [0, 0, 1, 1], [], []>} : vector<8x32xf32>, vector<32x32xf32>, vector<8x32xf32> -> vector<8x32xf32>
    %4 = vector.shape_cast %3 : vector<8x32xf32> to vector<1x8x32xf32>
    %c0_4 = arith.constant 0 : index
    %c0_5 = arith.constant 0 : index
    %c0_6 = arith.constant 0 : index
    %c0_7 = arith.constant 0 : index
    %5 = vector.load %arg2[%c0_4, %c0_5, %c0_6, %c0_7] : memref<1x8x8x16xf32, #tpu.memory_space<vmem>>, vector<1x8x8x16xf32>
    %6 = vector.shape_cast %5 : vector<1x8x8x16xf32> to vector<64x16xf32>
    %c0_8 = arith.constant 0 : index
    %c0_9 = arith.constant 0 : index
    %7 = vector.load %arg4[%c0_8, %c0_9] : memref<16x32xf32, #tpu.memory_space<vmem>>, vector<16x32xf32>
    %cst_10 = arith.constant dense<0.000000e+00> : vector<64x32xf32>
    %8 = tpu.matmul %6, %7, %cst_10 {dimension_numbers = #tpu.dot_dimension_numbers<[1], [0], [0], [1], [0, 0, 1, 1], [], []>} : vector<64x16xf32>, vector<16x32xf32>, vector<64x32xf32> -> vector<64x32xf32>
    %c0_11 = arith.constant 0 : index
    %c0_12 = arith.constant 0 : index
    %9 = vector.load %arg5[%c0_11, %c0_12] : memref<1x32xf32, #tpu.memory_space<vmem>>, vector<1x32xf32>
    %10 = vector.broadcast %9 : vector<1x32xf32> to vector<64x32xf32>
    %11 = arith.addf %8, %10 : vector<64x32xf32>
    %12 = vector.shape_cast %11 : vector<64x32xf32> to vector<1x8x8x32xf32>
    %13 = vector.shape_cast %4 : vector<1x8x32xf32> to vector<1x8x1x32xf32>
    %14 = vector.shape_cast %4 : vector<1x8x32xf32> to vector<1x1x8x32xf32>
    %15 = vector.broadcast %13 : vector<1x8x1x32xf32> to vector<1x8x8x32xf32>
    %16 = vector.broadcast %14 : vector<1x1x8x32xf32> to vector<1x8x8x32xf32>
    %17 = arith.addf %15, %16 : vector<1x8x8x32xf32>
    %18 = arith.addf %17, %12 : vector<1x8x8x32xf32>
    %cst_13 = arith.constant 0.000000e+00 : f32
    %19 = vector.broadcast %cst_13 : f32 to vector<1x8x8x32xf32>
    %20 = arith.maximumf %18, %19 : vector<1x8x8x32xf32>
    %c0_14 = arith.constant 0 : index
    %c0_15 = arith.constant 0 : index
    %21 = vector.load %arg6[%c0_14, %c0_15] : memref<1x32xf32, #tpu.memory_space<vmem>>, vector<1x32xf32>
    %22 = vector.shape_cast %21 : vector<1x32xf32> to vector<1x1x1x32xf32>
    %23 = vector.broadcast %22 : vector<1x1x1x32xf32> to vector<1x8x8x32xf32>
    %24 = arith.mulf %20, %23 : vector<1x8x8x32xf32>
    %cst_16 = arith.constant dense<0.000000e+00> : vector<1x8x8xf32>
    %25 = vector.multi_reduction <add>, %24, %cst_16 [3] : vector<1x8x8x32xf32> to vector<1x8x8xf32>
    %c0_17 = arith.constant 0 : index
    %c0_18 = arith.constant 0 : index
    %26 = vector.load %arg7[%c0_17, %c0_18] : memref<1x1xf32, #tpu.memory_space<vmem>>, vector<1x1xf32>
    %27 = vector.shape_cast %26 : vector<1x1xf32> to vector<1x1x1xf32>
    %28 = vector.broadcast %27 : vector<1x1x1xf32> to vector<1x8x8xf32>
    %29 = arith.addf %25, %28 : vector<1x8x8xf32>
    %30 = arith.negf %29 : vector<1x8x8xf32>
    %31 = math.exp %30 : vector<1x8x8xf32>
    %cst_19 = arith.constant 1.000000e+00 : f32
    %32 = vector.broadcast %cst_19 : f32 to vector<1x8x8xf32>
    %33 = arith.addf %32, %31 : vector<1x8x8xf32>
    %34 = arith.divf %32, %33 : vector<1x8x8xf32>
    "tpu.trace_start"() <{level = 10 : i32, message = "bij,bjh->bih"}> : () -> ()
    %cst_20 = arith.constant dense<0.000000e+00> : vector<1x8x32xf32>
    %35 = tpu.matmul %34, %0, %cst_20 {dimension_numbers = #tpu.dot_dimension_numbers<[2], [1], [1], [2], [0, 0, 0, 1, 1, 2], [0], [0]>} : vector<1x8x8xf32>, vector<1x8x32xf32>, vector<1x8x32xf32> -> vector<1x8x32xf32>
    "tpu.trace_stop"() : () -> ()
    %c0_21 = arith.constant 0 : index
    %c0_22 = arith.constant 0 : index
    %c0_23 = arith.constant 0 : index
    %36 = vector.load %arg8[%c0_21, %c0_22, %c0_23] : memref<1x8x32xf32, #tpu.memory_space<vmem>>, vector<1x8x32xf32>
    tpu.vector_store %arg8[%c0_21, %c0_22, %c0_23], %35 {strides = array<i32>} : memref<1x8x32xf32, #tpu.memory_space<vmem>>, vector<1x8x32xf32>,
    return
  }
  func.func @transform_0(%arg0: i32) -> (i32, i32, i32) {
    %c0_i32 = arith.constant 0 : i32
    %c0_i32_0 = arith.constant 0 : i32
    %c0_i32_1 = arith.constant 0 : i32
    return %arg0, %c0_i32, %c0_i32_0 : i32, i32, i32
  }
  func.func @transform_1(%arg0: i32) -> (i32, i32, i32, i32) {
    %c0_i32 = arith.constant 0 : i32
    %c0_i32_0 = arith.constant 0 : i32
    %c0_i32_1 = arith.constant 0 : i32
    %c0_i32_2 = arith.constant 0 : i32
    return %arg0, %c0_i32, %c0_i32_0, %c0_i32_1 : i32, i32, i32, i32
  }
  func.func @transform_2(%arg0: i32) -> (i32, i32) {
    %c0_i32 = arith.constant 0 : i32
    %c0_i32_0 = arith.constant 0 : i32
    %c0_i32_1 = arith.constant 0 : i32
    return %c0_i32, %c0_i32_0 : i32, i32
  }
  func.func @transform_3(%arg0: i32) -> (i32, i32) {
    %c0_i32 = arith.constant 0 : i32
    %c0_i32_0 = arith.constant 0 : i32
    %c0_i32_1 = arith.constant 0 : i32
    return %c0_i32, %c0_i32_0 : i32, i32
  }
  func.func @transform_4(%arg0: i32) -> (i32, i32) {
    %c0_i32 = arith.constant 0 : i32
    %c0_i32_0 = arith.constant 0 : i32
    %c0_i32_1 = arith.constant 0 : i32
    return %c0_i32, %c0_i32_0 : i32, i32
  }
  func.func @transform_5(%arg0: i32) -> (i32, i32) {
    %c0_i32 = arith.constant 0 : i32
    %c0_i32_0 = arith.constant 0 : i32
    %c0_i32_1 = arith.constant 0 : i32
    return %c0_i32, %c0_i32_0 : i32, i32
  }
  func.func @transform_6(%arg0: i32) -> (i32, i32) {
    %c0_i32 = arith.constant 0 : i32
    %c0_i32_0 = arith.constant 0 : i32
    %c0_i32_1 = arith.constant 0 : i32
    return %c0_i32, %c0_i32_0 : i32, i32
  }
  func.func @transform_7(%arg0: i32) -> (i32, i32, i32) {
    %c0_i32 = arith.constant 0 : i32
    %c0_i32_0 = arith.constant 0 : i32
    %c0_i32_1 = arith.constant 0 : i32
    return %arg0, %c0_i32, %c0_i32_0 : i32, i32, i32
  }
}

</mosaic_0001>

<llo_original>
// kernel: tpu_custom_call.1
$region0: #{tpu_custom_call.1}
  #allocation0 [shape = 'u32[]', space=smem, size = 0x4, offset = 0x4, fixed_abs, tag = 'smem constant byte address 0x4 - core index']
  #allocation1 [shape = 'u32[144,128]{1,0:T(1,128)}', space=vmem, size = 0x12000, scoped, tag = 'internal scratch']
  #allocation2 [shape = 'f32[1,1]{1,0:T(1,128)S(1)}', space=vmem, size = 0x200, scoped, tag = 'scoped memory for tpu_custom_call.1']
  %s0 = inlined_call_operand.hbm [shape: f32[2,8,32], index: 0, kind: input, shape index: {}]
  %s1 = inlined_call_operand.hbm [shape: f32[2,8,8,16], index: 1, kind: input, shape index: {}]
  %s2 = inlined_call_operand.hbm [shape: f32[32,32], index: 2, kind: input, shape index: {}]
  %s3 = inlined_call_operand.hbm [shape: f32[16,32], index: 3, kind: input, shape index: {}]
  %s4 = inlined_call_operand.vmem [shape: f32[1,32], index: 4, kind: input, shape index: {}]
  %s5 = inlined_call_operand.vmem [shape: f32[1,32], index: 5, kind: input, shape index: {}]
  %s6 = inlined_call_operand.<no memory space> [shape: f32[1,1], index: 6, kind: input, shape index: {}]
  %s7 = inlined_call_operand.hbm [shape: f32[2,8,32], index: 7, kind: output, shape index: {}]
  %s8 = sld [smem:[#allocation0]]
  $region77: #{tpu_custom_call.1} parent=0
    _
  %s10 = ssub.s32 1, %s8
  %s11 = scalar_select 0, %s10, %s8
  %v12 = vstv %s6
  %13 = vst [vmem:[#allocation2] sm:$0x1] %v12
  $region1: #{tpu_custom_call.1} parent=0
    #allocation3 [shape = 'u8[8192]{0}', space=vmem, size = 0x2000, scoped, tag = 'input window, operand 0']
    #allocation4 [shape = 's32[2]{0}', space=sflag, size = 0x8, scoped, tag = 'scoped memory for tpu_custom_call.1']
    #allocation5 [shape = 's32[2]{0}', space=sflag, size = 0x8, scoped, tag = 'scoped memory for tpu_custom_call.1']
    #allocation6 [shape = 'u8[65536]{0}', space=vmem, size = 0x10000, scoped, tag = 'input window, operand 1']
    #allocation7 [shape = 's32[2]{0}', space=sflag, size = 0x8, scoped, tag = 'scoped memory for tpu_custom_call.1']
    #allocation8 [shape = 'u8[16384]{0}', space=vmem, size = 0x4000, scoped, tag = 'input window, operand 2, single buffered']
    #allocation9 [shape = 'u8[8192]{0}', space=vmem, size = 0x2000, scoped, tag = 'input window, operand 3, single buffered']
    #allocation10 [shape = 's32[1]{0}', space=sflag, size = 0x4, scoped, tag = 'scoped memory for tpu_custom_call.1']
    #allocation11 [shape = 'u8[8192]{0}', space=vmem, size = 0x2000, scoped, tag = 'output window, operand 0']
    %14 = vsyncpa [#allocation4], 0
    %s15 = scalar_lea.sflag [#allocation4], 1
    %16 = vsyncpa %s15, 0
    %17 = vsyncpa [#allocation7], 0
    %s18 = scalar_lea.sflag [#allocation7], 1
    %19 = vsyncpa %s18, 0
    %20 = vsyncpa [#allocation10], 0
    %21 = vsyncpa [#allocation5], 0
    %s22 = scalar_lea.sflag [#allocation5], 1
    %23 = vsyncpa %s22, 0
    loop: start=0, step=1, limit=4
    $region2: #{tpu_custom_call.1} parent=1 // loop_pre_header
      _
    $region3: #{tpu_custom_call.1} parent=1 // loop_header
      %s25 = sphi 0, %s29
      %p26 = scmp.ge.s32.totalorder %s25, 4
      %s35 = sphi 0, %s37
      %s38 = sphi 0, %s35
      %s39 = sphi 0, %s38
      %s55 = sphi 0, %s39
      %s61 = sphi 0, %s63
      %s64 = sphi 0, %s61
      %s65 = sphi 0, %s64
      %s81 = sphi 0, %s65
      %s85 = sphi 0, %s85
      %s87 = sphi 0, %s85
      %s88 = sphi 0, %s87
      %s102 = sphi 0, %s88
      %s106 = sphi 0, %s106
      %s108 = sphi 0, %s106
      %s109 = sphi 0, %s108
      %s123 = sphi 0, %s109
      %s127 = sphi 0, %s127
      %s129 = sphi 0, %s127
      %s130 = sphi 0, %s129
      %s144 = sphi 0, %s130
      %s148 = sphi 0, %s148
      %s150 = sphi 0, %s148
      %s151 = sphi 0, %s150
      %s165 = sphi 0, %s151
      %s169 = sphi 0, %s169
      %s171 = sphi 0, %s169
      %s172 = sphi 0, %s171
      %s186 = sphi 0, %s172
      %s192 = sphi 0, %s194
      %s195 = sphi 0, %s192
      %s196 = sphi 0, %s195
      %s212 = sphi 0, %s196
    $region4: #{tpu_custom_call.1} parent=1 // loop_header_branch
      %28 = sbr.rel (%p26) target = $region8
    $region5: #{tpu_custom_call.1} parent=1 // loop_body
      %s30 = ssub.s32 %s25, 1
      %s31 = ssub.s32 %s25, 2
      %s32 = sadd.s32 %s25, 1
      %s33 = ssub.s32 %s25, %s32
      %p34 = scmp.eq.s32.totalorder %s33, 0
      %s36 = sadd.s32 %s35, 1
      %s37 = scalar_select %p34, %s35, %s36
      %p40 = pneg %p34
      %p41 = scmp.eq.s32.totalorder %s25, 1
      %p42 = por %p40, %p41
      %p43 = scmp.ne.s32.totalorder %s35, %s38
      %p44 = scmp.eq.s32.totalorder %s25, 0
      %p45 = por %p43, %p44
      %p46 = scmp.ne.s32.totalorder %s35, %s38
      %p47 = scmp.eq.s32.totalorder %s30, 1
      %p48 = por %p46, %p47
      %p49 = scmp.ne.s32.totalorder %s38, %s39
      %p50 = scmp.eq.s32.totalorder %s30, 0
      %p51 = por %p49, %p50
      %p52 = scmp.ne.s32.totalorder %s38, %s39
      %p53 = scmp.eq.s32.totalorder %s31, 1
      %p54 = por %p52, %p53
      %p56 = scmp.ne.s32.totalorder %s39, %s55
      %p57 = scmp.eq.s32.totalorder %s31, 0
      %p58 = por %p56, %p57
      %s59 = ssub.s32 %s25, %s32
      %p60 = scmp.eq.s32.totalorder %s59, 0
      %s62 = sadd.s32 %s61, 1
      %s63 = scalar_select %p60, %s61, %s62
      %p66 = pneg %p60
      %p67 = scmp.eq.s32.totalorder %s25, 1
      %p68 = por %p66, %p67
      %p69 = scmp.ne.s32.totalorder %s61, %s64
      %p70 = scmp.eq.s32.totalorder %s25, 0
      %p71 = por %p69, %p70
      %p72 = scmp.ne.s32.totalorder %s61, %s64
      %p73 = scmp.eq.s32.totalorder %s30, 1
      %p74 = por %p72, %p73
      %p75 = scmp.ne.s32.totalorder %s64, %s65
      %p76 = scmp.eq.s32.totalorder %s30, 0
      %p77 = por %p75, %p76
      %p78 = scmp.ne.s32.totalorder %s64, %s65
      %p79 = scmp.eq.s32.totalorder %s31, 1
      %p80 = por %p78, %p79
      %p82 = scmp.ne.s32.totalorder %s65, %s81
      %p83 = scmp.eq.s32.totalorder %s31, 0
      %p84 = por %p82, %p83
      %s86 = sadd.s32 %s85, 1
      %p89 = scmp.eq.s32.totalorder %s25, 1
      %p90 = scmp.ne.s32.totalorder %s85, %s87
      %p91 = scmp.eq.s32.totalorder %s25, 0
      %p92 = por %p90, %p91
      %p93 = scmp.ne.s32.totalorder %s85, %s87
      %p94 = scmp.eq.s32.totalorder %s30, 1
      %p95 = por %p93, %p94
      %p96 = scmp.ne.s32.totalorder %s87, %s88
      %p97 = scmp.eq.s32.totalorder %s30, 0
      %p98 = por %p96, %p97
      %p99 = scmp.ne.s32.totalorder %s87, %s88
      %p100 = scmp.eq.s32.totalorder %s31, 1
      %p101 = por %p99, %p100
      %p103 = scmp.ne.s32.totalorder %s88, %s102
      %p104 = scmp.eq.s32.totalorder %s31, 0
      %p105 = por %p103, %p104
      %s107 = sadd.s32 %s106, 1
      %p110 = scmp.eq.s32.totalorder %s25, 1
      %p111 = scmp.ne.s32.totalorder %s106, %s108
      %p112 = scmp.eq.s32.totalorder %s25, 0
      %p113 = por %p111, %p112
      %p114 = scmp.ne.s32.totalorder %s106, %s108
      %p115 = scmp.eq.s32.totalorder %s30, 1
      %p116 = por %p114, %p115
      %p117 = scmp.ne.s32.totalorder %s108, %s109
      %p118 = scmp.eq.s32.totalorder %s30, 0
      %p119 = por %p117, %p118
      %p120 = scmp.ne.s32.totalorder %s108, %s109
      %p121 = scmp.eq.s32.totalorder %s31, 1
      %p122 = por %p120, %p121
      %p124 = scmp.ne.s32.totalorder %s109, %s123
      %p125 = scmp.eq.s32.totalorder %s31, 0
      %p126 = por %p124, %p125
      %s128 = sadd.s32 %s127, 1
      %p131 = scmp.eq.s32.totalorder %s25, 1
      %p132 = scmp.ne.s32.totalorder %s127, %s129
      %p133 = scmp.eq.s32.totalorder %s25, 0
      %p134 = por %p132, %p133
      %p135 = scmp.ne.s32.totalorder %s127, %s129
      %p136 = scmp.eq.s32.totalorder %s30, 1
      %p137 = por %p135, %p136
      %p138 = scmp.ne.s32.totalorder %s129, %s130
      %p139 = scmp.eq.s32.totalorder %s30, 0
      %p140 = por %p138, %p139
      %p141 = scmp.ne.s32.totalorder %s129, %s130
      %p142 = scmp.eq.s32.totalorder %s31, 1
      %p143 = por %p141, %p142
      %p145 = scmp.ne.s32.totalorder %s130, %s144
      %p146 = scmp.eq.s32.totalorder %s31, 0
      %p147 = por %p145, %p146
      %s149 = sadd.s32 %s148, 1
      %p152 = scmp.eq.s32.totalorder %s25, 1
      %p153 = scmp.ne.s32.totalorder %s148, %s150
      %p154 = scmp.eq.s32.totalorder %s25, 0
      %p155 = por %p153, %p154
      %p156 = scmp.ne.s32.totalorder %s148, %s150
      %p157 = scmp.eq.s32.totalorder %s30, 1
      %p158 = por %p156, %p157
      %p159 = scmp.ne.s32.totalorder %s150, %s151
      %p160 = scmp.eq.s32.totalorder %s30, 0
      %p161 = por %p159, %p160
      %p162 = scmp.ne.s32.totalorder %s150, %s151
      %p163 = scmp.eq.s32.totalorder %s31, 1
      %p164 = por %p162, %p163
      %p166 = scmp.ne.s32.totalorder %s151, %s165
      %p167 = scmp.eq.s32.totalorder %s31, 0
      %p168 = por %p166, %p167
      %s170 = sadd.s32 %s169, 1
      %p173 = scmp.eq.s32.totalorder %s25, 1
      %p174 = scmp.ne.s32.totalorder %s169, %s171
      %p175 = scmp.eq.s32.totalorder %s25, 0
      %p176 = por %p174, %p175
      %p177 = scmp.ne.s32.totalorder %s169, %s171
      %p178 = scmp.eq.s32.totalorder %s30, 1
      %p179 = por %p177, %p178
      %p180 = scmp.ne.s32.totalorder %s171, %s172
      %p181 = scmp.eq.s32.totalorder %s30, 0
      %p182 = por %p180, %p181
      %p183 = scmp.ne.s32.totalorder %s171, %s172
      %p184 = scmp.eq.s32.totalorder %s31, 1
      %p185 = por %p183, %p184
      %p187 = scmp.ne.s32.totalorder %s172, %s186
      %p188 = scmp.eq.s32.totalorder %s31, 0
      %p189 = por %p187, %p188
      %s190 = ssub.s32 %s25, %s32
      %p191 = scmp.eq.s32.totalorder %s190, 0
      %s193 = sadd.s32 %s192, 1
      %s194 = scalar_select %p191, %s192, %s193
      %p197 = pneg %p191
      %p198 = scmp.eq.s32.totalorder %s25, 1
      %p199 = por %p197, %p198
      %p200 = scmp.ne.s32.totalorder %s192, %s195
      %p201 = scmp.eq.s32.totalorder %s25, 0
      %p202 = por %p200, %p201
      %p203 = scmp.ne.s32.totalorder %s192, %s195
      %p204 = scmp.eq.s32.totalorder %s30, 1
      %p205 = por %p203, %p204
      %p206 = scmp.ne.s32.totalorder %s195, %s196
      %p207 = scmp.eq.s32.totalorder %s30, 0
      %p208 = por %p206, %p207
      %p209 = scmp.ne.s32.totalorder %s195, %s196
      %p210 = scmp.eq.s32.totalorder %s31, 1
      %p211 = por %p209, %p210
      %p213 = scmp.ne.s32.totalorder %s196, %s212
      %p214 = scmp.eq.s32.totalorder %s31, 0
      %p215 = por %p213, %p214
      %p216 = scmp.le.s32.totalorder 1, %s25
      %p217 = scmp.lt.s32.totalorder %s25, 3
      %p218 = pnand %p216, %p217
      %p219 = pneg %p218
      // Predicated region
      $region9: #{tpu_custom_call.1} parent=5 // pred_check
        _
      $region10: #{tpu_custom_call.1} parent=5 // pred_check_branch
        %221 = sbr.rel (%p218) target = $region12
      $region11: #{tpu_custom_call.1} parent=5 // pred_region
        %s222 = ssub.s32 %s25, 1
        // Predicated region
        $region13: #{tpu_custom_call.1} parent=11 // pred_check
          %p223 = pneg %p98
        $region14: #{tpu_custom_call.1} parent=11 // pred_check_branch
          %225 = sbr.rel (%p223) target = $region16
        $region15: #{tpu_custom_call.1} parent=11 // pred_region
          %s227 = ssub.s32 512, 512
          %228 = vsyncadd [#allocation7], %s227
          %s229 = sshll.u32 [#allocation8], 4
          %s230 = int_to_ptr.vmem [resolvable:$true] %s229
          %235 = dma.hbm_to_vmem [thread:$0]  %s2, 512, %s230, [#allocation7], 128, 128, 8
        $region16: #{tpu_custom_call.1} parent=11 // pred_fallthru
          _
        // Predicated region
        $region17: #{tpu_custom_call.1} parent=11 // pred_check
          %p236 = pneg %p119
        $region18: #{tpu_custom_call.1} parent=11 // pred_check_branch
          %238 = sbr.rel (%p236) target = $region20
        $region19: #{tpu_custom_call.1} parent=11 // pred_region
          %s240 = ssub.s32 256, 256
          %241 = vsyncadd [#allocation10], %s240
          %s242 = sshll.u32 [#allocation9], 4
          %s243 = int_to_ptr.vmem [resolvable:$true] %s242
          %248 = dma.hbm_to_vmem [thread:$0]  %s3, 256, %s243, [#allocation10], 128, 128, 8
        $region20: #{tpu_custom_call.1} parent=11 // pred_fallthru
          _
        // Predicated region
        $region21: #{tpu_custom_call.1} parent=11 // pred_check
          %p249 = pneg %p140
        $region22: #{tpu_custom_call.1} parent=11 // pred_check_branch
          %251 = sbr.rel (%p249) target = $region24
        $region23: #{tpu_custom_call.1} parent=11 // pred_region
          _
        $region24: #{tpu_custom_call.1} parent=11 // pred_fallthru
          _
        // Predicated region
        $region25: #{tpu_custom_call.1} parent=11 // pred_check
          %p252 = pneg %p161
        $region26: #{tpu_custom_call.1} parent=11 // pred_check_branch
          %254 = sbr.rel (%p252) target = $region28
        $region27: #{tpu_custom_call.1} parent=11 // pred_region
          _
        $region28: #{tpu_custom_call.1} parent=11 // pred_fallthru
          _
        // Predicated region
        $region29: #{tpu_custom_call.1} parent=11 // pred_check
          %p255 = pneg %p182
        $region30: #{tpu_custom_call.1} parent=11 // pred_check_branch
          %257 = sbr.rel (%p255) target = $region32
        $region31: #{tpu_custom_call.1} parent=11 // pred_region
          _
        $region32: #{tpu_custom_call.1} parent=11 // pred_fallthru
          _
      $region12: #{tpu_custom_call.1} parent=5 // pred_fallthru
        _
      %p258 = scmp.lt.s32.totalorder %s25, 2
      // Predicated region
      $region33: #{tpu_custom_call.1} parent=5 // pred_check
        %p259 = pneg %p258
      $region34: #{tpu_custom_call.1} parent=5 // pred_check_branch
        %261 = sbr.rel (%p259) target = $region36
      $region35: #{tpu_custom_call.1} parent=5 // pred_region
        // Predicated region
        $region37: #{tpu_custom_call.1} parent=35 // pred_check
          %p262 = pneg %p45
        $region38: #{tpu_custom_call.1} parent=35 // pred_check_branch
          %264 = sbr.rel (%p262) target = $region40
        $region39: #{tpu_custom_call.1} parent=35 // pred_region
          %s265 = sand.u32 %s35, 1
          %s266 = scalar_lea.sflag [#allocation4], %s265
          %s267 = sand.u32 %s35, 1
          %s268 = smul.addr %s267, 8
          %s269 = scalar_lea.vmem [#allocation3], %s268
          %s271 = ssub.s32 128, 128
          %272 = vsyncadd %s266, %s271
          %s273 = smul.addr %s25, 128
          %s274 = scalar_lea.hbm %s0, %s273
          %s276 = sshll.u32 %s269, 4
          %s277 = int_to_ptr.vmem [resolvable:$true] %s276
          %279 = dma.hbm_to_vmem [thread:$0]  %s274, 128, %s277, %s266
        $region40: #{tpu_custom_call.1} parent=35 // pred_fallthru
          _
        // Predicated region
        $region41: #{tpu_custom_call.1} parent=35 // pred_check
          %p280 = pneg %p71
        $region42: #{tpu_custom_call.1} parent=35 // pred_check_branch
          %282 = sbr.rel (%p280) target = $region44
        $region43: #{tpu_custom_call.1} parent=35 // pred_region
          %s283 = sand.u32 %s25, 1
          %s284 = scalar_lea.sflag [#allocation7], %s283
          %s285 = sand.u32 %s61, 1
          %s286 = smul.addr %s285, 64
          %s287 = scalar_lea.vmem [#allocation6], %s286
          %s289 = ssub.s32 1024, 1024
          %290 = vsyncadd %s284, %s289
          %s291 = smul.addr %s25, 8
          %s292 = smul.addr %s291, 128
          %s293 = scalar_lea.hbm %s1, %s292
          %s294 = sshll.u32 %s287, 4
          %s295 = int_to_ptr.vmem [resolvable:$true] %s294
          %300 = dma.hbm_to_vmem [thread:$0]  %s293, 1024, %s295, %s284, 128, 128, 8
        $region44: #{tpu_custom_call.1} parent=35 // pred_fallthru
          _
      $region36: #{tpu_custom_call.1} parent=5 // pred_fallthru
        _
      %p301 = scmp.le.s32.totalorder 1, %s25
      %p302 = scmp.lt.s32.totalorder %s25, 3
      %p303 = pnand %p301, %p302
      %p304 = pneg %p303
      // Predicated region
      $region45: #{tpu_custom_call.1} parent=5 // pred_check
        _
      $region46: #{tpu_custom_call.1} parent=5 // pred_check_branch
        %306 = sbr.rel (%p303) target = $region48
      $region47: #{tpu_custom_call.1} parent=5 // pred_region
        %s307 = ssub.s32 %s25, 1
        %s308 = sand.u32 %s38, 1
        %s309 = scalar_lea.sflag [#allocation4], %s308
        %s310 = sand.u32 %s38, 1
        %s311 = smul.addr %s310, 8
        %s312 = scalar_lea.vmem [#allocation3], %s311
        // Predicated region
        $region49: #{tpu_custom_call.1} parent=47 // pred_check
          %p313 = pneg %p51
        $region50: #{tpu_custom_call.1} parent=47 // pred_check_branch
          %315 = sbr.rel (%p313) target = $region52
        $region51: #{tpu_custom_call.1} parent=47 // pred_region
          %316 = dma.done %s309, 128
        $region52: #{tpu_custom_call.1} parent=47 // pred_fallthru
          _
        %s317 = sand.u32 %s30, 1
        %s318 = scalar_lea.sflag [#allocation7], %s317
        %s319 = sand.u32 %s64, 1
        %s320 = smul.addr %s319, 64
        %s321 = scalar_lea.vmem [#allocation6], %s320
        // Predicated region
        $region53: #{tpu_custom_call.1} parent=47 // pred_check
          %p322 = pneg %p77
        $region54: #{tpu_custom_call.1} parent=47 // pred_check_branch
          %324 = sbr.rel (%p322) target = $region56
        $region55: #{tpu_custom_call.1} parent=47 // pred_region
          %325 = dma.done %s318, 1024
        $region56: #{tpu_custom_call.1} parent=47 // pred_fallthru
          _
        // Predicated region
        $region57: #{tpu_custom_call.1} parent=47 // pred_check
          %p326 = pneg %p98
        $region58: #{tpu_custom_call.1} parent=47 // pred_check_branch
          %328 = sbr.rel (%p326) target = $region60
        $region59: #{tpu_custom_call.1} parent=47 // pred_region
          %329 = dma.done [#allocation7], 512
        $region60: #{tpu_custom_call.1} parent=47 // pred_fallthru
          _
        // Predicated region
        $region61: #{tpu_custom_call.1} parent=47 // pred_check
          %p330 = pneg %p119
        $region62: #{tpu_custom_call.1} parent=47 // pred_check_branch
          %332 = sbr.rel (%p330) target = $region64
        $region63: #{tpu_custom_call.1} parent=47 // pred_region
          %333 = dma.done [#allocation10], 256
        $region64: #{tpu_custom_call.1} parent=47 // pred_fallthru
          _
        %s334 = sand.u32 %s38, 1
        %s335 = scalar_lea.sflag [#allocation4], %s334
        %s336 = sand.u32 %s38, 1
        %s337 = smul.addr %s336, 8
        %s338 = scalar_lea.vmem [#allocation3], %s337
        %p339 = pneg %p51
        %p340 = pneg %p48
        %s341 = sand.u32 %s30, 1
        %s342 = scalar_lea.sflag [#allocation7], %s341
        %s343 = sand.u32 %s64, 1
        %s344 = smul.addr %s343, 64
        %s345 = scalar_lea.vmem [#allocation6], %s344
        %p346 = pneg %p77
        %p347 = pneg %p74
        %p348 = pneg %p98
        %p349 = pneg %p95
        %p350 = pneg %p119
        %p351 = pneg %p116
        %p352 = pneg %p140
        %p353 = pneg %p137
        %p354 = pneg %p161
        %p355 = pneg %p158
        %p356 = pneg %p182
        %p357 = pneg %p179
        %p358 = pneg %p208
        %p359 = pneg %p205
        %s360 = sand.u32 %s195, 1
        %s361 = scalar_lea.sflag [#allocation5], %s360
        %s362 = sand.u32 %s195, 1
        %s363 = smul.addr %s362, 8
        %s364 = scalar_lea.vmem [#allocation11], %s363
        %v365 = vld [vmem:[%s312] sm:$0xff]
        %v366 = vld [vmem:[#allocation8] sm:$0xff]
        %v367 = vld [vmem:[#allocation8 + $0x8] sm:$0xff]
        %v368 = vld [vmem:[#allocation8 + $0x10] sm:$0xff]
        %v369 = vld [vmem:[#allocation8 + $0x18] sm:$0xff]
        %vm370 = vcmask 261120
        %v372 = vsel %vm370, %v365, 0
        %374 = vmatprep.subr.mxu0 0.0
        %375 = vmatpush1.msra.mxu0 %v366
        %376 = vmatprep.subr.mxu0 0.0
        %377 = vmatpush1.msra.mxu0 %v367
        %378 = vmatprep.subr.mxu0 0.0
        %379 = vmatpush1.msra.mxu0 %v368
        %380 = vmatprep.subr.mxu0 0.0
        %381 = vmatpush1.msra.mxu0 %v369
        %382 = vmatprep.subr.mxu0 0.0
        %383 = vmatpush1.msra.mxu0 0.0
        %384 = vmatprep.subr.mxu0 0.0
        %385 = vmatpush1.msra.mxu0 0.0
        %386 = vmatprep.subr.mxu0 0.0
        %387 = vmatpush1.msra.mxu0 0.0
        %388 = vmatprep.subr.mxu0 0.0
        %389 = vmatpush1.msra.mxu0 0.0
        %390 = vmatprep.subr.mxu0 0.0
        %391 = vmatpush1.msra.mxu0 0.0
        %392 = vmatprep.subr.mxu0 0.0
        %393 = vmatpush1.msra.mxu0 0.0
        %394 = vmatprep.subr.mxu0 0.0
        %395 = vmatpush1.msra.mxu0 0.0
        %396 = vmatprep.subr.mxu0 0.0
        %397 = vmatpush1.msra.mxu0 0.0
        %398 = vmatprep.subr.mxu0 0.0
        %399 = vmatpush1.msra.mxu0 0.0
        %400 = vmatprep.subr.mxu0 0.0
        %401 = vmatpush1.msra.mxu0 0.0
        %402 = vmatprep.subr.mxu0 0.0
        %403 = vmatpush1.msra.mxu0 0.0
        %404 = vmatprep.subr.mxu0 0.0
        %405 = vmatpush1.msra.mxu0 0.0
        %406 = vmatprep.subr.mxu0 0.0
        %407 = vmatpush1.msra.mxu0 0.0
        %408 = vmatprep.subr.mxu0 0.0
        %409 = vmatpush1.msra.mxu0 0.0
        %410 = vmatprep.subr.mxu0 0.0
        %411 = vmatpush1.msra.mxu0 0.0
        %412 = vmatprep.subr.mxu0 0.0
        %413 = vmatpush1.msra.mxu0 0.0
        %414 = vmatprep.subr.mxu0 0.0
        %415 = vmatpush1.msra.mxu0 0.0
        %416 = vmatprep.subr.mxu0 0.0
        %417 = vmatpush1.msra.mxu0 0.0
        %418 = vmatprep.subr.mxu0 0.0
        %419 = vmatpush1.msra.mxu0 0.0
        %420 = vmatprep.subr.mxu0 0.0
        %421 = vmatpush1.msra.mxu0 0.0
        %422 = vmatprep.subr.mxu0 0.0
        %423 = vmatpush1.msra.mxu0 0.0
        %424 = vmatprep.subr.mxu0 0.0
        %425 = vmatpush1.msra.mxu0 0.0
        %426 = vmatprep.subr.mxu0 0.0
        %427 = vmatpush1.msra.mxu0 0.0
        %428 = vmatprep.subr.mxu0 0.0
        %429 = vmatpush1.msra.mxu0 0.0
        %430 = vmatprep.subr.mxu0 0.0
        %431 = vmatpush1.msra.mxu0 0.0
        %432 = vmatprep.subr.mxu0 0.0
        %433 = vmatpush1.msra.mxu0 0.0
        %434 = vmatprep.subr.mxu0 0.0
        %435 = vmatpush1.msra.mxu0 0.0
        %436 = vmatprep.subr.mxu0 0.0
        %437 = vmatpush1.msra.mxu0 0.0
        %438 = vmatprep.mubr.f32.mxu0 0.0
        %439 = vmatmul.mubr.f32.gmra.mrb[0].mxu0 %v372
        %v440 = vpop.f32.mrb[0].mxu0
        %v441 = vadd.f32 0.0, %v440
        %v442 = vpop.f32.mrb[0].mxu0
        %443 = vdwg.mxu0
        %v444 = vld [vmem:[%s321] sm:$0xff]
        %v445 = vld [vmem:[%s321 + $0x8] sm:$0xff]
        %v446 = vld [vmem:[%s321 + $0x10] sm:$0xff]
        %v447 = vld [vmem:[%s321 + $0x18] sm:$0xff]
        %v448 = vld [vmem:[%s321 + $0x20] sm:$0xff]
        %v449 = vld [vmem:[%s321 + $0x28] sm:$0xff]
        %v450 = vld [vmem:[%s321 + $0x30] sm:$0xff]
        %v451 = vld [vmem:[%s321 + $0x38] sm:$0xff]
        %v452 = vld [vmem:[#allocation9] sm:$0xff]
        %v453 = vld [vmem:[#allocation9 + $0x8] sm:$0xff]
        %v454 = vld [vmem:[%s4] sm:$0x1]
        %v456 = vlaneseq
        %v457 = vshrl.u32 %v456, 7
        %v458 = vsub.s32 0, %v457
        %v459 = vrot.slane %v454, %v458
        %vm461 = vcmask 130048
        %v463 = vsel %vm461, %v444, 0
        %v466 = vsel %vm461, %v445, 0
        %v469 = vsel %vm461, %v446, 0
        %v472 = vsel %vm461, %v447, 0
        %v475 = vsel %vm461, %v448, 0
        %v478 = vsel %vm461, %v449, 0
        %v481 = vsel %vm461, %v450, 0
        %v484 = vsel %vm461, %v451, 0
        %486 = vmatprep.subr.mxu0 0.0
        %487 = vmatpush1.msra.mxu0 %v452
        %488 = vmatprep.subr.mxu0 0.0
        %489 = vmatpush1.msra.mxu0 %v453
        %490 = vmatprep.subr.mxu0 0.0
        %491 = vmatpush1.msra.mxu0 0.0
        %492 = vmatprep.subr.mxu0 0.0
        %493 = vmatpush1.msra.mxu0 0.0
        %494 = vmatprep.subr.mxu0 0.0
        %495 = vmatpush1.msra.mxu0 0.0
        %496 = vmatprep.subr.mxu0 0.0
        %497 = vmatpush1.msra.mxu0 0.0
        %498 = vmatprep.subr.mxu0 0.0
        %499 = vmatpush1.msra.mxu0 0.0
        %500 = vmatprep.subr.mxu0 0.0
        %501 = vmatpush1.msra.mxu0 0.0
        %502 = vmatprep.subr.mxu0 0.0
        %503 = vmatpush1.msra.mxu0 0.0
        %504 = vmatprep.subr.mxu0 0.0
        %505 = vmatpush1.msra.mxu0 0.0
        %506 = vmatprep.subr.mxu0 0.0
        %507 = vmatpush1.msra.mxu0 0.0
        %508 = vmatprep.subr.mxu0 0.0
        %509 = vmatpush1.msra.mxu0 0.0
        %510 = vmatprep.subr.mxu0 0.0
        %511 = vmatpush1.msra.mxu0 0.0
        %512 = vmatprep.subr.mxu0 0.0
        %513 = vmatpush1.msra.mxu0 0.0
        %514 = vmatprep.subr.mxu0 0.0
        %515 = vmatpush1.msra.mxu0 0.0
        %516 = vmatprep.subr.mxu0 0.0
        %517 = vmatpush1.msra.mxu0 0.0
        %518 = vmatprep.subr.mxu0 0.0
        %519 = vmatpush1.msra.mxu0 0.0
        %520 = vmatprep.subr.mxu0 0.0
        %521 = vmatpush1.msra.mxu0 0.0
        %522 = vmatprep.subr.mxu0 0.0
        %523 = vmatpush1.msra.mxu0 0.0
        %524 = vmatprep.subr.mxu0 0.0
        %525 = vmatpush1.msra.mxu0 0.0
        %526 = vmatprep.subr.mxu0 0.0
        %527 = vmatpush1.msra.mxu0 0.0
        %528 = vmatprep.subr.mxu0 0.0
        %529 = vmatpush1.msra.mxu0 0.0
        %530 = vmatprep.subr.mxu0 0.0
        %531 = vmatpush1.msra.mxu0 0.0
        %532 = vmatprep.subr.mxu0 0.0
        %533 = vmatpush1.msra.mxu0 0.0
        %534 = vmatprep.subr.mxu0 0.0
        %535 = vmatpush1.msra.mxu0 0.0
        %536 = vmatprep.subr.mxu0 0.0
        %537 = vmatpush1.msra.mxu0 0.0
        %538 = vmatprep.subr.mxu0 0.0
        %539 = vmatpush1.msra.mxu0 0.0
        %540 = vmatprep.subr.mxu0 0.0
        %541 = vmatpush1.msra.mxu0 0.0
        %542 = vmatprep.subr.mxu0 0.0
        %543 = vmatpush1.msra.mxu0 0.0
        %544 = vmatprep.subr.mxu0 0.0
        %545 = vmatpush1.msra.mxu0 0.0
        %546 = vmatprep.subr.mxu0 0.0
        %547 = vmatpush1.msra.mxu0 0.0
        %548 = vmatprep.subr.mxu0 0.0
        %549 = vmatpush1.msra.mxu0 0.0
        %550 = vmatprep.mubr.f32.mxu0 0.0
        %551 = vmatmul.mubr.f32.gmra.mrb[0].mxu0 %v463
        %v552 = vpop.f32.mrb[0].mxu0
        %v553 = vadd.f32 %v459, %v552
        %v554 = vpop.f32.mrb[0].mxu0
        %555 = vmatprep.mubr.f32.mxu0 0.0
        %556 = vmatmul.mubr.f32.gmra.mrb[0].mxu0 %v466
        %v557 = vpop.f32.mrb[0].mxu0
        %v558 = vadd.f32 %v459, %v557
        %v559 = vpop.f32.mrb[0].mxu0
        %560 = vmatprep.mubr.f32.mxu0 0.0
        %561 = vmatmul.mubr.f32.gmra.mrb[0].mxu0 %v469
        %v562 = vpop.f32.mrb[0].mxu0
        %v563 = vadd.f32 %v459, %v562
        %v564 = vpop.f32.mrb[0].mxu0
        %565 = vmatprep.mubr.f32.mxu0 0.0
        %566 = vmatmul.mubr.f32.gmra.mrb[0].mxu0 %v472
        %v567 = vpop.f32.mrb[0].mxu0
        %v568 = vadd.f32 %v459, %v567
        %v569 = vpop.f32.mrb[0].mxu0
        %570 = vmatprep.mubr.f32.mxu0 0.0
        %571 = vmatmul.mubr.f32.gmra.mrb[0].mxu0 %v475
        %v572 = vpop.f32.mrb[0].mxu0
        %v573 = vadd.f32 %v459, %v572
        %v574 = vpop.f32.mrb[0].mxu0
        %575 = vmatprep.mubr.f32.mxu0 0.0
        %576 = vmatmul.mubr.f32.gmra.mrb[0].mxu0 %v478
        %v577 = vpop.f32.mrb[0].mxu0
        %v578 = vadd.f32 %v459, %v577
        %v579 = vpop.f32.mrb[0].mxu0
        %580 = vmatprep.mubr.f32.mxu0 0.0
        %581 = vmatmul.mubr.f32.gmra.mrb[0].mxu0 %v481
        %v582 = vpop.f32.mrb[0].mxu0
        %v583 = vadd.f32 %v459, %v582
        %v584 = vpop.f32.mrb[0].mxu0
        %585 = vmatprep.mubr.f32.mxu0 0.0
        %586 = vmatmul.mubr.f32.gmra.mrb[0].mxu0 %v484
        %v587 = vpop.f32.mrb[0].mxu0
        %v588 = vadd.f32 %v459, %v587
        %v589 = vpop.f32.mrb[0].mxu0
        %590 = vdwg.mxu0
        %v592 = vcombine.high %v441, %v441
        %v594 = vunpack.c.l.s4 1966171168
        %v595 = vunpack.c.0.s8 %v594
        %v596 = vlaneseq
        %v597 = vshrl.u32 %v596, 7
        %v598 = vsub.s32 %v595, %v597
        %v599 = vrot.slane %v441, %v598
        %v601 = vunpack.c.l.s4 1966171168
        %v602 = vunpack.c.0.s8 %v601
        %v603 = vlaneseq
        %v604 = vshrl.u32 %v603, 7
        %v605 = vsub.s32 %v602, %v604
        %v606 = vrot.slane %v592, %v605
        %v607 = vcombine.high %v599, %v599
        %v608 = vcombine.high %v606, %v606
        %v610 = vunpack.c.l.s4 1966171168
        %v611 = vunpack.c.0.s8 %v610
        %v612 = vlaneseq
        %v613 = vshrl.u32 %v612, 7
        %v614 = vsub.s32 %v611, %v613
        %v615 = vrot.slane %v599, %v614
        %v617 = vunpack.c.l.s4 1966171168
        %v618 = vunpack.c.0.s8 %v617
        %v619 = vlaneseq
        %v620 = vshrl.u32 %v619, 7
        %v621 = vsub.s32 %v618, %v620
        %v622 = vrot.slane %v606, %v621
        %v624 = vunpack.c.l.s4 1966171168
        %v625 = vunpack.c.0.s8 %v624
        %v626 = vlaneseq
        %v627 = vshrl.u32 %v626, 7
        %v628 = vsub.s32 %v625, %v627
        %v629 = vrot.slane %v607, %v628
        %v631 = vunpack.c.l.s4 1966171168
        %v632 = vunpack.c.0.s8 %v631
        %v633 = vlaneseq
        %v634 = vshrl.u32 %v633, 7
        %v635 = vsub.s32 %v632, %v634
        %v636 = vrot.slane %v608, %v635
        %v637 = vcombine.high %v615, %v615
        %v638 = vcombine.high %v622, %v622
        %v639 = vcombine.high %v629, %v629
        %v640 = vcombine.high %v636, %v636
        %v641 = vlaneseq
        %v642 = vshrl.u32 %v641, 7
        %v643 = vsub.s32 0, %v642
        %v644 = vrot.slane %v615, %v643
        %v645 = vlaneseq
        %v646 = vshrl.u32 %v645, 7
        %v647 = vsub.s32 0, %v646
        %v648 = vrot.slane %v629, %v647
        %v649 = vlaneseq
        %v650 = vshrl.u32 %v649, 7
        %v651 = vsub.s32 0, %v650
        %v652 = vrot.slane %v637, %v651
        %v653 = vlaneseq
        %v654 = vshrl.u32 %v653, 7
        %v655 = vsub.s32 0, %v654
        %v656 = vrot.slane %v639, %v655
        %v657 = vlaneseq
        %v658 = vshrl.u32 %v657, 7
        %v659 = vsub.s32 0, %v658
        %v660 = vrot.slane %v622, %v659
        %v661 = vlaneseq
        %v662 = vshrl.u32 %v661, 7
        %v663 = vsub.s32 0, %v662
        %v664 = vrot.slane %v636, %v663
        %v665 = vlaneseq
        %v666 = vshrl.u32 %v665, 7
        %v667 = vsub.s32 0, %v666
        %v668 = vrot.slane %v638, %v667
        %v669 = vlaneseq
        %v670 = vshrl.u32 %v669, 7
        %v671 = vsub.s32 0, %v670
        %v672 = vrot.slane %v640, %v671
        %v681 = vadd.f32 %v644, %v441
        %v682 = vadd.f32 %v648, %v441
        %v683 = vadd.f32 %v652, %v441
        %v684 = vadd.f32 %v656, %v441
        %v685 = vadd.f32 %v660, %v441
        %v686 = vadd.f32 %v664, %v441
        %v687 = vadd.f32 %v668, %v441
        %v688 = vadd.f32 %v672, %v441
        %v689 = vadd.f32 %v681, %v553
        %v690 = vadd.f32 %v682, %v558
        %v691 = vadd.f32 %v683, %v563
        %v692 = vadd.f32 %v684, %v568
        %v693 = vadd.f32 %v685, %v573
        %v694 = vadd.f32 %v686, %v578
        %v695 = vadd.f32 %v687, %v583
        %v696 = vadd.f32 %v688, %v588
        %v697 = vmax.f32 %v689, 0.0
        %v698 = vmax.f32 %v690, 0.0
        %v699 = vmax.f32 %v691, 0.0
        %v700 = vmax.f32 %v692, 0.0
        %v701 = vmax.f32 %v693, 0.0
        %v702 = vmax.f32 %v694, 0.0
        %v703 = vmax.f32 %v695, 0.0
        %v704 = vmax.f32 %v696, 0.0
        %v705 = vld [vmem:[%s5] sm:$0x1]
        %v707 = vlaneseq
        %v708 = vshrl.u32 %v707, 7
        %v709 = vsub.s32 0, %v708
        %v710 = vrot.slane %v705, %v709
        %v712 = vmul.f32 %v697, %v710
        %v713 = vmul.f32 %v698, %v710
        %v714 = vmul.f32 %v699, %v710
        %v715 = vmul.f32 %v700, %v710
        %v716 = vmul.f32 %v701, %v710
        %v717 = vmul.f32 %v702, %v710
        %v718 = vmul.f32 %v703, %v710
        %v719 = vmul.f32 %v704, %v710
        %v720 = vsel %vm370, %v712, 0.0
        %721 = vadd.xlane.f32.xlu0 %v720
        %v722 = vpop.xlane.xlu0 %721
        %v723 = vsel %vm370, %v713, 0.0
        %724 = vadd.xlane.f32.xlu0 %v723
        %v725 = vpop.xlane.xlu0 %724
        %v726 = vsel %vm370, %v714, 0.0
        %727 = vadd.xlane.f32.xlu0 %v726
        %v728 = vpop.xlane.xlu0 %727
        %v729 = vsel %vm370, %v715, 0.0
        %730 = vadd.xlane.f32.xlu0 %v729
        %v731 = vpop.xlane.xlu0 %730
        %v732 = vsel %vm370, %v716, 0.0
        %733 = vadd.xlane.f32.xlu0 %v732
        %v734 = vpop.xlane.xlu0 %733
        %v735 = vsel %vm370, %v717, 0.0
        %736 = vadd.xlane.f32.xlu0 %v735
        %v737 = vpop.xlane.xlu0 %736
        %v738 = vsel %vm370, %v718, 0.0
        %739 = vadd.xlane.f32.xlu0 %v738
        %v740 = vpop.xlane.xlu0 %739
        %v741 = vsel %vm370, %v719, 0.0
        %742 = vadd.xlane.f32.xlu0 %v741
        %v743 = vpop.xlane.xlu0 %742
        %v744 = vld [vmem:[#allocation2] sm:$0x1]
        %v746 = vlaneseq
        %v747 = vshrl.u32 %v746, 7
        %v748 = vsub.s32 0, %v747
        %v749 = vrot.slane %v744, %v748
        %750 = vset.pattern.permute.xlu0 0
        %751 = vperm.xlu0 %750, %v749
        %v752 = vpop.permute.xlu0 %751
        %v754 = vadd.f32 %v722, %v752
        %v755 = vadd.f32 %v725, %v752
        %v756 = vadd.f32 %v728, %v752
        %v757 = vadd.f32 %v731, %v752
        %v758 = vadd.f32 %v734, %v752
        %v759 = vadd.f32 %v737, %v752
        %v760 = vadd.f32 %v740, %v752
        %v761 = vadd.f32 %v743, %v752
        %v762 = vxor.u32 %v754, 2147483648
        %v763 = vxor.u32 %v755, 2147483648
        %v764 = vxor.u32 %v756, 2147483648
        %v765 = vxor.u32 %v757, 2147483648
        %v766 = vxor.u32 %v758, 2147483648
        %v767 = vxor.u32 %v759, 2147483648
        %v768 = vxor.u32 %v760, 2147483648
        %v769 = vxor.u32 %v761, 2147483648
        %v770 = vmul.f32 %v762, 1.442695
        %v771 = vpow.pop %v770
        %v772 = vmul.f32 %v763, 1.442695
        %v773 = vpow.pop %v772
        %v774 = vmul.f32 %v764, 1.442695
        %v775 = vpow.pop %v774
        %v776 = vmul.f32 %v765, 1.442695
        %v777 = vpow.pop %v776
        %v778 = vmul.f32 %v766, 1.442695
        %v779 = vpow.pop %v778
        %v780 = vmul.f32 %v767, 1.442695
        %v781 = vpow.pop %v780
        %v782 = vmul.f32 %v768, 1.442695
        %v783 = vpow.pop %v782
        %v784 = vmul.f32 %v769, 1.442695
        %v785 = vpow.pop %v784
        %v786 = vadd.f32 %v771, 1.0
        %v787 = vadd.f32 %v773, 1.0
        %v788 = vadd.f32 %v775, 1.0
        %v789 = vadd.f32 %v777, 1.0
        %v790 = vadd.f32 %v779, 1.0
        %v791 = vadd.f32 %v781, 1.0
        %v792 = vadd.f32 %v783, 1.0
        %v793 = vadd.f32 %v785, 1.0
        %v794 = vrcp.pop %v786
        %v795 = vmul.f32 1.0, %v794
        %v796 = vrcp.pop %v787
        %v797 = vmul.f32 1.0, %v796
        %v798 = vrcp.pop %v788
        %v799 = vmul.f32 1.0, %v798
        %v800 = vrcp.pop %v789
        %v801 = vmul.f32 1.0, %v800
        %v802 = vrcp.pop %v790
        %v803 = vmul.f32 1.0, %v802
        %v804 = vrcp.pop %v791
        %v805 = vmul.f32 1.0, %v804
        %v806 = vrcp.pop %v792
        %v807 = vmul.f32 1.0, %v806
        %v808 = vrcp.pop %v793
        %v809 = vmul.f32 1.0, %v808
        %v818 = vlaneseq
        %v819 = vand.u32 %v818, 127
        %v820 = vlaneseq
        %v821 = vshrl.u32 %v820, 7
        %v822 = vsub.s32 %v819, %v821
        %v823 = vrot.slane %v795, %v822
        %v824 = vlaneseq
        %v825 = vshrl.u32 %v824, 7
        %v826 = vsub.s32 %v819, %v825
        %v827 = vrot.slane %v797, %v826
        %v828 = vlaneseq
        %v829 = vshrl.u32 %v828, 7
        %v830 = vsub.s32 %v819, %v829
        %v831 = vrot.slane %v799, %v830
        %v832 = vlaneseq
        %v833 = vshrl.u32 %v832, 7
        %v834 = vsub.s32 %v819, %v833
        %v835 = vrot.slane %v801, %v834
        %v836 = vlaneseq
        %v837 = vshrl.u32 %v836, 7
        %v838 = vsub.s32 %v819, %v837
        %v839 = vrot.slane %v803, %v838
        %v840 = vlaneseq
        %v841 = vshrl.u32 %v840, 7
        %v842 = vsub.s32 %v819, %v841
        %v843 = vrot.slane %v805, %v842
        %v844 = vlaneseq
        %v845 = vshrl.u32 %v844, 7
        %v846 = vsub.s32 %v819, %v845
        %v847 = vrot.slane %v807, %v846
        %v848 = vlaneseq
        %v849 = vshrl.u32 %v848, 7
        %v850 = vsub.s32 %v819, %v849
        %v851 = vrot.slane %v809, %v850
        %vm852 = vcmask 1041409
        %v853 = vsel %vm852, %v827, %v823
        %vm854 = vcmask 1042434
        %v855 = vsel %vm854, %v831, %v853
        %vm856 = vcmask 1043459
        %v857 = vsel %vm856, %v835, %v855
        %vm858 = vcmask 1044484
        %v859 = vsel %vm858, %v839, %v857
        %vm860 = vcmask 1045509
        %v861 = vsel %vm860, %v843, %v859
        %vm862 = vcmask 1046534
        %v863 = vsel %vm862, %v847, %v861
        %vm864 = vcmask 1047559
        %v865 = vsel %vm864, %v851, %v863
        %vm866 = vcmask 64512
        %v867 = vsel %vm866, %v865, 0
        %869 = vmatprep.subr.mxu0 0.0
        %870 = vmatpush1.msra.mxu0 %v365
        %871 = vmatprep.subr.mxu0 0.0
        %872 = vmatpush1.msra.mxu0 0.0
        %873 = vmatprep.subr.mxu0 0.0
        %874 = vmatpush1.msra.mxu0 0.0
        %875 = vmatprep.subr.mxu0 0.0
        %876 = vmatpush1.msra.mxu0 0.0
        %877 = vmatprep.subr.mxu0 0.0
        %878 = vmatpush1.msra.mxu0 0.0
        %879 = vmatprep.subr.mxu0 0.0
        %880 = vmatpush1.msra.mxu0 0.0
        %881 = vmatprep.subr.mxu0 0.0
        %882 = vmatpush1.msra.mxu0 0.0
        %883 = vmatprep.subr.mxu0 0.0
        %884 = vmatpush1.msra.mxu0 0.0
        %885 = vmatprep.subr.mxu0 0.0
        %886 = vmatpush1.msra.mxu0 0.0
        %887 = vmatprep.subr.mxu0 0.0
        %888 = vmatpush1.msra.mxu0 0.0
        %889 = vmatprep.subr.mxu0 0.0
        %890 = vmatpush1.msra.mxu0 0.0
        %891 = vmatprep.subr.mxu0 0.0
        %892 = vmatpush1.msra.mxu0 0.0
        %893 = vmatprep.subr.mxu0 0.0
        %894 = vmatpush1.msra.mxu0 0.0
        %895 = vmatprep.subr.mxu0 0.0
        %896 = vmatpush1.msra.mxu0 0.0
        %897 = vmatprep.subr.mxu0 0.0
        %898 = vmatpush1.msra.mxu0 0.0
        %899 = vmatprep.subr.mxu0 0.0
        %900 = vmatpush1.msra.mxu0 0.0
        %901 = vmatprep.subr.mxu0 0.0
        %902 = vmatpush1.msra.mxu0 0.0
        %903 = vmatprep.subr.mxu0 0.0
        %904 = vmatpush1.msra.mxu0 0.0
        %905 = vmatprep.subr.mxu0 0.0
        %906 = vmatpush1.msra.mxu0 0.0
        %907 = vmatprep.subr.mxu0 0.0
        %908 = vmatpush1.msra.mxu0 0.0
        %909 = vmatprep.subr.mxu0 0.0
        %910 = vmatpush1.msra.mxu0 0.0
        %911 = vmatprep.subr.mxu0 0.0
        %912 = vmatpush1.msra.mxu0 0.0
        %913 = vmatprep.subr.mxu0 0.0
        %914 = vmatpush1.msra.mxu0 0.0
        %915 = vmatprep.subr.mxu0 0.0
        %916 = vmatpush1.msra.mxu0 0.0
        %917 = vmatprep.subr.mxu0 0.0
        %918 = vmatpush1.msra.mxu0 0.0
        %919 = vmatprep.subr.mxu0 0.0
        %920 = vmatpush1.msra.mxu0 0.0
        %921 = vmatprep.subr.mxu0 0.0
        %922 = vmatpush1.msra.mxu0 0.0
        %923 = vmatprep.subr.mxu0 0.0
        %924 = vmatpush1.msra.mxu0 0.0
        %925 = vmatprep.subr.mxu0 0.0
        %926 = vmatpush1.msra.mxu0 0.0
        %927 = vmatprep.subr.mxu0 0.0
        %928 = vmatpush1.msra.mxu0 0.0
        %929 = vmatprep.subr.mxu0 0.0
        %930 = vmatpush1.msra.mxu0 0.0
        %931 = vmatprep.subr.mxu0 0.0
        %932 = vmatpush1.msra.mxu0 0.0
        %933 = vmatprep.mubr.f32.mxu0 0.0
        %934 = vmatmul.mubr.f32.gmra.mrb[0].mxu0 %v867
        %v935 = vpop.f32.mrb[0].mxu0
        %v936 = vadd.f32 0.0, %v935
        %v937 = vpop.f32.mrb[0].mxu0
        %938 = vdwg.mxu0
        %939 = vst.msk [vmem:[%s364] sm:$0xff] %vm370, %v936
        %s940 = sand.u32 %s195, 1
        %s941 = scalar_lea.sflag [#allocation5], %s940
        %s942 = sand.u32 %s195, 1
        %s943 = smul.addr %s942, 8
        %s944 = scalar_lea.vmem [#allocation11], %s943
        // Predicated region
        $region65: #{tpu_custom_call.1} parent=47 // pred_check
          %p945 = pneg %p205
        $region66: #{tpu_custom_call.1} parent=47 // pred_check_branch
          %947 = sbr.rel (%p945) target = $region68
        $region67: #{tpu_custom_call.1} parent=47 // pred_region
          %s949 = ssub.s32 128, 128
          %950 = vsyncadd %s941, %s949
          %s951 = smul.addr %s30, 128
          %s952 = scalar_lea.hbm %s7, %s951
          %s954 = sshll.u32 %s944, 4
          %s955 = int_to_ptr.vmem [resolvable:$true] %s954
          %957 = dma.vmem_to_hbm [thread:$0]  %s955, 128, %s952, %s941
        $region68: #{tpu_custom_call.1} parent=47 // pred_fallthru
          _
      $region48: #{tpu_custom_call.1} parent=5 // pred_fallthru
        _
      %p958 = scmp.le.s32.totalorder 2, %s25
      // Predicated region
      $region69: #{tpu_custom_call.1} parent=5 // pred_check
        %p959 = pneg %p958
      $region70: #{tpu_custom_call.1} parent=5 // pred_check_branch
        %961 = sbr.rel (%p959) target = $region72
      $region71: #{tpu_custom_call.1} parent=5 // pred_region
        %s962 = ssub.s32 %s25, 2
        // Predicated region
        $region73: #{tpu_custom_call.1} parent=71 // pred_check
          %p963 = pneg %p211
        $region74: #{tpu_custom_call.1} parent=71 // pred_check_branch
          %965 = sbr.rel (%p963) target = $region76
        $region75: #{tpu_custom_call.1} parent=71 // pred_region
          %s966 = sand.u32 %s196, 1
          %s967 = scalar_lea.sflag [#allocation5], %s966
          %s968 = sand.u32 %s196, 1
          %s969 = smul.addr %s968, 8
          %s970 = scalar_lea.vmem [#allocation11], %s969
          %971 = dma.done %s967, 128
        $region76: #{tpu_custom_call.1} parent=71 // pred_fallthru
          _
      $region72: #{tpu_custom_call.1} parent=5 // pred_fallthru
        _
    $region6: #{tpu_custom_call.1} parent=1 // loop_footer
      %s29 = sadd.s32 1, %s25
    $region7: #{tpu_custom_call.1} parent=1 // loop_footer_branch
      %24 = sbr.rel target = $region3
    $region8: #{tpu_custom_call.1} parent=1 // loop_exit
      _
    %972 = vsyncpa [#allocation4], 1
    %s973 = scalar_lea.sflag [#allocation4], 1
    %974 = vsyncpa %s973, 1
    %975 = vsyncpa [#allocation7], 1
    %s976 = scalar_lea.sflag [#allocation7], 1
    %977 = vsyncpa %s976, 1
    %978 = vsyncpa [#allocation10], 1
    %979 = vsyncpa [#allocation5], 1
    %s980 = scalar_lea.sflag [#allocation5], 1
    %981 = vsyncpa %s980, 1

</llo_original>
